<compile_context>
chip_gen: v5e
topology: v5e:2x2
jax: 0.10.0
libtpu: 0.0.40
codegen_flags: <defaults>
</compile_context>

<pallas_src>
import functools

import jax
import jax.numpy as jnp
from jax import lax
from jax.experimental import pallas as pl
from jax.experimental.pallas import tpu as pltpu


def _round_up(x, m):
    return ((x + m - 1) // m) * m


def _vmem_budget_bytes():
    """Per-generation VMEM budget: ~1/4 of physical VMEM.

    128 MiB (v5e/v6e) -> 32 MiB budget; 64 MiB (v7x) -> 16 MiB budget.
    Falls back to a conservative 16 MiB if the query is unavailable.
    """
    try:
        info = pltpu.get_tpu_info()
        phys = int(getattr(info, "vmem_capacity_bytes", 64 << 20))
    except Exception:  # pragma: no cover - defensive fallback
        phys = 64 << 20
    return max(phys // 4, 8 << 20)


def _disc_fused_kernel(x_ref, w_ref, b_ref, dis_ref, pred_ref, *, num_classes):
    """Fused matmul + masked log-softmax.

    x_ref:    [block_b, R]        (bf16 or f32)
    w_ref:    [R, N_pad]          (cols 0..C-1 = classifier, col N_pad-1 = dis head, rest zero)
    b_ref:    [1, N_pad]          (f32)
    dis_ref:  [block_b, 1]        (f32)  raw discriminator output
    pred_ref: [block_b, C]        (f32)  log_softmax over the C classifier columns
    """
    logits = jnp.dot(x_ref[...], w_ref[...],
                     preferred_element_type=jnp.float32) + b_ref[...]

    n_pad = logits.shape[1]
    col = lax.broadcasted_iota(jnp.int32, logits.shape, dimension=1)
    is_cls = col < num_classes                      # valid classifier columns

    # Numerically-stable log-softmax restricted to the classifier columns.
    neg_inf = jnp.float32(-jnp.inf)
    masked = jnp.where(is_cls, logits, neg_inf)
    m = jnp.max(masked, axis=1, keepdims=True)      # finite: >=1 valid column
    shifted = masked - m
    lse = jnp.log(jnp.sum(jnp.exp(shifted), axis=1, keepdims=True))
    logp = shifted - lse

    pred_ref[...] = logp[:, :num_classes].astype(pred_ref.dtype)   # lane-aligned slice
    dis_ref[...] = logits[:, n_pad - 1:n_pad].astype(dis_ref.dtype)


def discriminator_forward(x, w_dis, b_dis, w_cls, b_cls, *,
                          block_b=None,
                          compute_dtype=jnp.bfloat16,
                          vmem_budget_bytes=None):
    """x: [B, R]; w_dis: [R, 1]; b_dis: [1]/[1,1]; w_cls: [R, C]; b_cls: [C]/[1,C]."""
    B, R = x.shape
    C = w_cls.shape[1]
    N = 1 + C
    N_pad = _round_up(N, 128)           # no extra padding beyond the 128-lane minimum

    compute_dtype = jnp.dtype(compute_dtype)
    x_c = x.astype(compute_dtype)

    # --- fuse + pad weights/biases to a lane-dense [R, N_pad] slab (wrapper-side, cheap) ---
    w_fused = jnp.zeros((R, N_pad), dtype=compute_dtype)
    w_fused = w_fused.at[:, :C].set(w_cls.astype(compute_dtype))
    w_fused = w_fused.at[:, N_pad - 1:].set(w_dis.astype(compute_dtype))
    b_fused = jnp.zeros((1, N_pad), dtype=jnp.float32)
    b_fused = b_fused.at[:, :C].set(jnp.reshape(b_cls, (1, C)).astype(jnp.float32))
    b_fused = b_fused.at[:, N_pad - 1:].set(jnp.reshape(b_dis, (1, 1)).astype(jnp.float32))

    if vmem_budget_bytes is None:
        vmem_budget_bytes = _vmem_budget_bytes()

    # --- batch tile: fit double-buffered x/out blocks + resident weights in budget ---
    c_item = compute_dtype.itemsize
    resident_bytes = 2 * (R * N_pad * c_item + N_pad * 4)          # weight + bias (2 buffers each)
    per_row = 2 * (R * c_item) + 2 * (N * 4)                       # x block + both output blocks
    if block_b is None:
        blk = (vmem_budget_bytes - resident_bytes) // max(per_row, 1)
        blk = int(max(8, min(blk, 1024)))
        blk = max(8, (blk // 8) * 8)
        block_b = blk
    # Guarantee >=2 grid steps whenever B allows it so the "parallel" batch axis
    # can be sharded across v7x's two TensorCores (no-op for tiny B).
    block_b = min(block_b, max(8, _round_up(pl.cdiv(B, 2), 8)))
    block_b = max(8, (block_b // 8) * 8)

    B_pad = _round_up(B, block_b)
    if B_pad != B:
        x_c = jnp.pad(x_c, ((0, B_pad - B), (0, 0)))

    grid = (B_pad // block_b,)

    # Keep the compiler's VMEM limit in sync with the tile math.
    vmem_need = resident_bytes + block_b * per_row + (1 << 20)
    vmem_limit = int(min(max(vmem_need, vmem_budget_bytes), 100 << 20))

    cost = pl.CostEstimate(
        flops=2 * B * R * N,
        transcendentals=2 * B * C,                  # exp + log per valid classifier element
        bytes_accessed=(B * R * c_item              # x
                        + R * N_pad * c_item        # fused weight
                        + N_pad * 4                 # fused bias
                        + B * N * 4),               # dis_out + pred
    )

    dis_pad, pred_pad = pl.pallas_call(
        functools.partial(_disc_fused_kernel, num_classes=C),
        out_shape=(jax.ShapeDtypeStruct((B_pad, 1), jnp.float32),
                   jax.ShapeDtypeStruct((B_pad, C), jnp.float32)),
        grid=grid,
        in_specs=[
            pl.BlockSpec((block_b, R), lambda i: (i, 0)),   # x walks the batch axis
            pl.BlockSpec((R, N_pad), lambda i: (0, 0)),     # fused weight stays resident
            pl.BlockSpec((1, N_pad), lambda i: (0, 0)),     # fused bias stays resident
        ],
        out_specs=(
            pl.BlockSpec((block_b, 1), lambda i: (i, 0)),
            pl.BlockSpec((block_b, C), lambda i: (i, 0)),
        ),
        compiler_params=pltpu.CompilerParams(
            dimension_semantics=("parallel",),
            vmem_limit_bytes=vmem_limit),
        cost_estimate=cost,
    )(x_c, w_fused, b_fused)

    if B_pad != B:
        dis_pad = dis_pad[:B]
        pred_pad = pred_pad[:B]
    return dis_pad, pred_pad


def reference_forward(x, w_dis, b_dis, w_cls, b_cls):
    dis = x @ w_dis + jnp.reshape(b_dis, (1, 1))
    logits = x @ w_cls + jnp.reshape(b_cls, (1, -1))
    pred = jax.nn.log_softmax(logits, axis=1)
    return dis, pred


if __name__ == "__main__":
    # Small shapes consistent with the module: opt.resSize, opt.nclass_seen.
    batch = 8
    res_size = 32        # opt.resSize
    nclass_seen = 16     # opt.nclass_seen

    key = jax.random.PRNGKey(0)
    kx, kwd, kwc = jax.random.split(key, 3)

    # Input features.
    x = jax.random.normal(kx, (batch, res_size), dtype=jnp.float32)

    # weights_init: Linear weights ~ N(0, 0.02), biases = 0.
    # Stored pre-transposed as [in, out] for the kernel.
    w_dis = 0.02 * jax.random.normal(kwd, (res_size, 1), dtype=jnp.float32)
    b_dis = jnp.zeros((1, 1), dtype=jnp.float32)
    w_cls = 0.02 * jax.random.normal(kwc, (res_size, nclass_seen), dtype=jnp.float32)
    b_cls = jnp.zeros((1, nclass_seen), dtype=jnp.float32)

    ref_dis, ref_pred = reference_forward(x, w_dis, b_dis, w_cls, b_cls)

    # f32 compute path: tight check against the pure-JAX reference.
    dis32, pred32 = discriminator_forward(x, w_dis, b_dis, w_cls, b_cls,
                                          compute_dtype=jnp.float32)
    jax.block_until_ready((dis32, pred32))
    assert dis32.shape == (batch, 1)
    assert pred32.shape == (batch, nclass_seen)
    assert jnp.allclose(dis32, ref_dis, atol=1e-5, rtol=1e-5)
    assert jnp.allclose(pred32, ref_pred, atol=1e-5, rtol=1e-5)

    # Default bf16 MXU path (production): loose tolerance vs the f32 reference.
    dis_bf, pred_bf = discriminator_forward(x, w_dis, b_dis, w_cls, b_cls)
    jax.block_until_ready((dis_bf, pred_bf))
    assert dis_bf.shape == (batch, 1)
    assert pred_bf.shape == (batch, nclass_seen)
    assert jnp.allclose(dis_bf, ref_dis, atol=2e-2, rtol=2e-2)
    assert jnp.allclose(pred_bf, ref_pred, atol=2e-2, rtol=2e-2)

    print("KERNEL_OK")
</pallas_src>

<mosaic_0001>
module attributes {stable_mosaic.version = 11 : i64} {
  func.func @_disc_fused_kernel(%arg0: i32, %arg1: memref<8x32xf32, #tpu.memory_space<vmem>>, %arg2: memref<32x128xf32, #tpu.memory_space<vmem>>, %arg3: memref<1x128xf32, #tpu.memory_space<vmem>>, %arg4: memref<8x1xf32, #tpu.memory_space<vmem>>, %arg5: memref<8x16xf32, #tpu.memory_space<vmem>>) attributes {dimension_semantics = [#tpu.dimension_semantics<parallel>], iteration_bounds = array<i64: 1>, scalar_prefetch = 0 : i64, scratch_operands = 0 : i64, tpu.core_type = #tpu.core_type<tc>, window_params = [{transform_indices = @transform_0, window_bounds = array<i64: 8, 32>}, {pipeline_mode = #tpu.pipeline_mode<synchronous>, transform_indices = @transform_1, window_bounds = array<i64: 32, 128>}, {pipeline_mode = #tpu.pipeline_mode<synchronous>, transform_indices = @transform_2, window_bounds = array<i64: 1, 128>}, {transform_indices = @transform_3, window_bounds = array<i64: 8, 1>}, {transform_indices = @transform_4, window_bounds = array<i64: 8, 16>}]} {
    %c0 = arith.constant 0 : index
    %c0_0 = arith.constant 0 : index
    %0 = vector.load %arg1[%c0, %c0_0] : memref<8x32xf32, #tpu.memory_space<vmem>>, vector<8x32xf32>
    %c0_1 = arith.constant 0 : index
    %c0_2 = arith.constant 0 : index
    %1 = vector.load %arg2[%c0_1, %c0_2] : memref<32x128xf32, #tpu.memory_space<vmem>>, vector<32x128xf32>
    %cst = arith.constant dense<0.000000e+00> : vector<8x128xf32>
    %2 = tpu.matmul %0, %1, %cst {dimension_numbers = #tpu.dot_dimension_numbers<[1], [0], [0], [1], [0, 0, 1, 1], [], []>} : vector<8x32xf32>, vector<32x128xf32>, vector<8x128xf32> -> vector<8x128xf32>
    %c0_3 = arith.constant 0 : index
    %c0_4 = arith.constant 0 : index
    %3 = vector.load %arg3[%c0_3, %c0_4] : memref<1x128xf32, #tpu.memory_space<vmem>>, vector<1x128xf32>
    %4 = vector.broadcast %3 : vector<1x128xf32> to vector<8x128xf32>
    %5 = arith.addf %2, %4 : vector<8x128xf32>
    %6 = tpu.iota {dimensions = array<i32: 1>} : vector<8x128xi32>
    %c16_i32 = arith.constant 16 : i32
    %7 = vector.broadcast %c16_i32 : i32 to vector<8x128xi32>
    %8 = arith.cmpi slt, %6, %7 : vector<8x128xi32>
    %cst_5 = arith.constant 0xFF800000 : f32
    %9 = vector.broadcast %cst_5 : f32 to vector<8x128xf32>
    %10 = arith.select %8, %5, %9 : vector<8x128xi1>, vector<8x128xf32>
    %cst_6 = arith.constant dense<0xFF800000> : vector<8xf32>
    %11 = vector.multi_reduction <maximumf>, %10, %cst_6 [1] : vector<8x128xf32> to vector<8xf32>
    %12 = vector.shape_cast %11 : vector<8xf32> to vector<8x1xf32>
    %13 = vector.broadcast %12 : vector<8x1xf32> to vector<8x128xf32>
    %14 = arith.subf %10, %13 : vector<8x128xf32>
    %15 = math.exp %14 : vector<8x128xf32>
    %cst_7 = arith.constant dense<0.000000e+00> : vector<8xf32>
    %16 = vector.multi_reduction <add>, %15, %cst_7 [1] : vector<8x128xf32> to vector<8xf32>
    %17 = vector.shape_cast %16 : vector<8xf32> to vector<8x1xf32>
    %18 = math.log %17 : vector<8x1xf32>
    %19 = vector.broadcast %18 : vector<8x1xf32> to vector<8x128xf32>
    %20 = arith.subf %14, %19 : vector<8x128xf32>
    %21 = vector.extract_strided_slice %20 {offsets = [0, 0], sizes = [8, 16], strides = [1, 1]} : vector<8x128xf32> to vector<8x16xf32>
    %c0_8 = arith.constant 0 : index
    %c0_9 = arith.constant 0 : index
    %22 = vector.load %arg5[%c0_8, %c0_9] : memref<8x16xf32, #tpu.memory_space<vmem>>, vector<8x16xf32>
    tpu.vector_store %arg5[%c0_8, %c0_9], %21 {strides = array<i32>} : memref<8x16xf32, #tpu.memory_space<vmem>>, vector<8x16xf32>,
    %23 = vector.extract_strided_slice %5 {offsets = [0, 127], sizes = [8, 1], strides = [1, 1]} : vector<8x128xf32> to vector<8x1xf32>
    %c0_10 = arith.constant 0 : index
    %c0_11 = arith.constant 0 : index
    %24 = vector.load %arg4[%c0_10, %c0_11] : memref<8x1xf32, #tpu.memory_space<vmem>>, vector<8x1xf32>
    tpu.vector_store %arg4[%c0_10, %c0_11], %23 {strides = array<i32>} : memref<8x1xf32, #tpu.memory_space<vmem>>, vector<8x1xf32>,
    return
  }
  func.func @transform_0(%arg0: i32) -> (i32, i32) {
    %c0_i32 = arith.constant 0 : i32
    %c0_i32_0 = arith.constant 0 : i32
    return %arg0, %c0_i32 : i32, i32
  }
  func.func @transform_1(%arg0: i32) -> (i32, i32) {
    %c0_i32 = arith.constant 0 : i32
    %c0_i32_0 = arith.constant 0 : i32
    %c0_i32_1 = arith.constant 0 : i32
    return %c0_i32, %c0_i32_0 : i32, i32
  }
  func.func @transform_2(%arg0: i32) -> (i32, i32) {
    %c0_i32 = arith.constant 0 : i32
    %c0_i32_0 = arith.constant 0 : i32
    %c0_i32_1 = arith.constant 0 : i32
    return %c0_i32, %c0_i32_0 : i32, i32
  }
  func.func @transform_3(%arg0: i32) -> (i32, i32) {
    %c0_i32 = arith.constant 0 : i32
    %c0_i32_0 = arith.constant 0 : i32
    return %arg0, %c0_i32 : i32, i32
  }
  func.func @transform_4(%arg0: i32) -> (i32, i32) {
    %c0_i32 = arith.constant 0 : i32
    %c0_i32_0 = arith.constant 0 : i32
    return %arg0, %c0_i32 : i32, i32
  }
}

</mosaic_0001>

<llo_original>
// kernel: tpu_custom_call.1
$region0: #{tpu_custom_call.1}
  #allocation0 [shape = 'u32[]', space=smem, size = 0x4, offset = 0x4, fixed_abs, tag = 'smem constant byte address 0x4 - core index']
  #allocation1 [shape = 'u32[72,128]{1,0:T(1,128)}', space=vmem, size = 0x9000, scoped, tag = 'internal scratch']
  %s0 = inlined_call_operand.hbm [shape: f32[8,32], index: 0, kind: input, shape index: {}]
  %s1 = inlined_call_operand.hbm [shape: f32[32,128], index: 1, kind: input, shape index: {}]
  %s2 = inlined_call_operand.vmem [shape: f32[1,128], index: 2, kind: input, shape index: {}]
  %s3 = inlined_call_operand.vmem [shape: f32[8,1], index: 3, kind: output, shape index: {0}]
  %s4 = inlined_call_operand.hbm [shape: f32[8,16], index: 4, kind: output, shape index: {1}]
  %5 = xla_tuple %s3, %s4
  %s6 = sld [smem:[#allocation0]]
  $region38: #{tpu_custom_call.1} parent=0
    _
  %s8 = ssub.s32 1, %s6
  %s9 = scalar_select 0, %s8, %s6
  $region1: #{tpu_custom_call.1} parent=0
    #allocation2 [shape = 'u8[4096]{0}', space=vmem, size = 0x1000, scoped, tag = 'input window, operand 0, single buffered']
    #allocation3 [shape = 's32[1]{0}', space=sflag, size = 0x4, scoped, tag = 'scoped memory for tpu_custom_call.1']
    #allocation4 [shape = 's32[1]{0}', space=sflag, size = 0x4, scoped, tag = 'scoped memory for tpu_custom_call.1']
    #allocation5 [shape = 'u8[16384]{0}', space=vmem, size = 0x4000, scoped, tag = 'input window, operand 1, single buffered']
    #allocation6 [shape = 's32[1]{0}', space=sflag, size = 0x4, scoped, tag = 'scoped memory for tpu_custom_call.1']
    #allocation7 [shape = 'u8[4096]{0}', space=vmem, size = 0x1000, scoped, tag = 'output window, operand 1, single buffered']
    %10 = vsyncpa [#allocation3], 0
    %11 = vsyncpa [#allocation6], 0
    %12 = vsyncpa [#allocation4], 0
    // Predicated region
    $region2: #{tpu_custom_call.1} parent=1 // pred_check
      _
    $region3: #{tpu_custom_call.1} parent=1 // pred_check_branch
      %14 = sbr.rel (0) target = $region5
    $region4: #{tpu_custom_call.1} parent=1 // pred_region
      %16 = vsyncadd [#allocation3], 0
      %s18 = sshll.u32 %s0, 4
      %s19 = int_to_ptr.hbm [resolvable:$true] %s18
      %s20 = sshll.u32 [#allocation2], 4
      %s21 = int_to_ptr.vmem [resolvable:$true] %s20
      %23 = dma.hbm_to_vmem [thread:$0]  %s19, 128, %s21, [#allocation3]
    $region5: #{tpu_custom_call.1} parent=1 // pred_fallthru
      _
    // Predicated region
    $region6: #{tpu_custom_call.1} parent=1 // pred_check
      _
    $region7: #{tpu_custom_call.1} parent=1 // pred_check_branch
      %25 = sbr.rel (0) target = $region9
    $region8: #{tpu_custom_call.1} parent=1 // pred_region
      %27 = vsyncadd [#allocation6], 0
      %s28 = sshll.u32 %s1, 4
      %s29 = int_to_ptr.hbm [resolvable:$true] %s28
      %s30 = sshll.u32 [#allocation5], 4
      %s31 = int_to_ptr.vmem [resolvable:$true] %s30
      %36 = dma.hbm_to_vmem [thread:$0]  %s29, 512, %s31, [#allocation6], 128, 128, 8
    $region9: #{tpu_custom_call.1} parent=1 // pred_fallthru
      _
    // Predicated region
    $region10: #{tpu_custom_call.1} parent=1 // pred_check
      _
    $region11: #{tpu_custom_call.1} parent=1 // pred_check_branch
      %38 = sbr.rel (0) target = $region13
    $region12: #{tpu_custom_call.1} parent=1 // pred_region
      _
    $region13: #{tpu_custom_call.1} parent=1 // pred_fallthru
      _
    // Predicated region
    $region14: #{tpu_custom_call.1} parent=1 // pred_check
      _
    $region15: #{tpu_custom_call.1} parent=1 // pred_check_branch
      %40 = sbr.rel (0) target = $region17
    $region16: #{tpu_custom_call.1} parent=1 // pred_region
      %42 = dma.done [#allocation3], 128
    $region17: #{tpu_custom_call.1} parent=1 // pred_fallthru
      _
    // Predicated region
    $region18: #{tpu_custom_call.1} parent=1 // pred_check
      _
    $region19: #{tpu_custom_call.1} parent=1 // pred_check_branch
      %44 = sbr.rel (0) target = $region21
    $region20: #{tpu_custom_call.1} parent=1 // pred_region
      %46 = dma.done [#allocation6], 512
    $region21: #{tpu_custom_call.1} parent=1 // pred_fallthru
      _
    %v47 = vld [vmem:[#allocation2] sm:$0xff]
    %v48 = vld [vmem:[#allocation5] sm:$0xff]
    %v49 = vld [vmem:[#allocation5 + $0x8] sm:$0xff]
    %v50 = vld [vmem:[#allocation5 + $0x10] sm:$0xff]
    %v51 = vld [vmem:[#allocation5 + $0x18] sm:$0xff]
    %v52 = vld [vmem:[%s2] sm:$0x1]
    %v54 = vperm.slane %v52, 0
    %vm56 = vcmask 261120
    %v58 = vsel %vm56, %v47, 0
    %60 = vmatpush.msra.mxu0 0.0
    %61 = vmatpush.msra.mxu0 0.0
    %62 = vmatpush.msra.mxu0 0.0
    %63 = vmatpush.msra.mxu0 0.0
    %64 = vmatpush.msra.mxu0 0.0
    %65 = vmatpush.msra.mxu0 0.0
    %66 = vmatpush.msra.mxu0 0.0
    %67 = vmatpush.msra.mxu0 0.0
    %68 = vmatpush.msra.mxu0 0.0
    %69 = vmatpush.msra.mxu0 0.0
    %70 = vmatpush.msra.mxu0 0.0
    %71 = vmatpush.msra.mxu0 0.0
    %72 = vmatpush.msra.mxu0 %v51
    %73 = vmatpush.msra.mxu0 %v50
    %74 = vmatpush.msra.mxu0 %v49
    %75 = vmatpush.msra.mxu0 %v48
    %76 = vmatmul.f32.gmra.mxu0 %v58
    %v77 = vpop.f32.mrf.mxu0
    %v78 = vadd.f32 %v54, %v77
    %79 = vdwg.mxu0
    %v80 = vlaneseq
    %v81 = vand.u32 %v80, 127
    %vm82 = vcmp.lt.s32.totalorder %v81, 16
    %v83 = vsel %vm82, %v78, -inf
    %84 = vmax.xlane.f32.xlu0 %v83
    %v85 = vpop.xlane.xlu0 %84
    %v86 = vsub.f32 %v83, %v85
    %v87 = vmul.f32 %v86, 1.442695
    %v88 = vpow.pop %v87
    %89 = vadd.xlane.f32.xlu0 %v88
    %v90 = vpop.xlane.xlu0 %89
    %v91 = vlog2.pop %v90
    %v92 = vmul.f32 %v91, 0.6931472
    %v93 = vsub.f32 %v86, %v92
    %vm94 = vcmask 130048
    %95 = vst.msk [vmem:[#allocation7] sm:$0xff] %vm94, %v93
    %97 = vrot.lane.b32.xlu0 %v78, 1
    %v98 = vpop.permute.xlu0 %97
    %vm100 = vcmask 7168
    %101 = vst.msk [vmem:[%s3] sm:$0xff] %vm100, %v98
    // Predicated region
    $region22: #{tpu_custom_call.1} parent=1 // pred_check
      _
    $region23: #{tpu_custom_call.1} parent=1 // pred_check_branch
      %103 = sbr.rel (0) target = $region25
    $region24: #{tpu_custom_call.1} parent=1 // pred_region
      _
    $region25: #{tpu_custom_call.1} parent=1 // pred_fallthru
      _
    // Predicated region
    $region26: #{tpu_custom_call.1} parent=1 // pred_check
      _
    $region27: #{tpu_custom_call.1} parent=1 // pred_check_branch
      %105 = sbr.rel (0) target = $region29
    $region28: #{tpu_custom_call.1} parent=1 // pred_region
      %107 = vsyncadd [#allocation4], 0
      %s109 = sshll.u32 [#allocation7], 4
      %s110 = int_to_ptr.vmem [resolvable:$true] %s109
      %s111 = sshll.u32 %s4, 4
      %s112 = int_to_ptr.hbm [resolvable:$true] %s111
      %114 = dma.vmem_to_hbm [thread:$0]  %s110, 128, %s112, [#allocation4]
    $region29: #{tpu_custom_call.1} parent=1 // pred_fallthru
      _
    // Predicated region
    $region30: #{tpu_custom_call.1} parent=1 // pred_check
      _
    $region31: #{tpu_custom_call.1} parent=1 // pred_check_branch
      %116 = sbr.rel (0) target = $region33
    $region32: #{tpu_custom_call.1} parent=1 // pred_region
      _
    $region33: #{tpu_custom_call.1} parent=1 // pred_fallthru
      _
    // Predicated region
    $region34: #{tpu_custom_call.1} parent=1 // pred_check
      _
    $region35: #{tpu_custom_call.1} parent=1 // pred_check_branch
      %118 = sbr.rel (0) target = $region37
    $region36: #{tpu_custom_call.1} parent=1 // pred_region
      %120 = dma.done [#allocation4], 128
    $region37: #{tpu_custom_call.1} parent=1 // pred_fallthru
      _
    %121 = vsyncpa [#allocation3], 1
    %122 = vsyncpa [#allocation6], 1
    %123 = vsyncpa [#allocation4], 1

</llo_original>
